<compile_context>
chip_gen: v7x
topology: tpu7x:2x2x1
jax: 0.10.0
libtpu: 0.0.40
codegen_flags: <defaults>
</compile_context>

<pallas_src>
import functools

import jax
import jax.numpy as jnp
from jax.experimental import pallas as pl
from jax.experimental.pallas import tpu as pltpu


def _round_up(x, m):
    return (x + m - 1) // m * m


def _pick_tiles(n_pad):
    # n_pad is always a multiple of 128.
    tm = 256 if n_pad % 256 == 0 else 128
    tk = 512 if n_pad % 512 == 0 else (256 if n_pad % 256 == 0 else 128)
    return tm, tk


def _auto_project_first(in_channels, out_channels):
    # Shrink channel width before the (dominant) A_hat propagation when the
    # padded output width is smaller than the padded input width.
    return _round_up(out_channels, 128) < _round_up(in_channels, 128)


# Conservative resident-A budget for the fused small-N path (keeps well under
# v7x's 64 MiB physical VMEM; vmem_limit_bytes is raised on that call).
_FUSED_VMEM_BUDGET = 40 * 1024 * 1024


# ----------------------------------------------------------------------------
# Graph preprocessing (JAX glue).
# ----------------------------------------------------------------------------
# TODO(synk): the edge_index scatter/densification (torch.sparse_coo_tensor +
# scatter_add) is data-dependent; it is kept as JAX preprocessing rather than a
# Pallas gather/scatter kernel.
def build_graph_operators(edge_index, n_nodes, n_pad):
    src = edge_index[0]
    dst = edge_index[1]
    ones = jnp.ones((edge_index.shape[1],), jnp.float32)
    a = jnp.zeros((n_nodes, n_nodes), jnp.float32).at[src, dst].add(ones)
    a_tilde = a + jnp.eye(n_nodes, dtype=jnp.float32)
    deg = jnp.zeros((n_nodes,), jnp.float32).at[src].add(ones)   # degree() in torch
    d = (deg + 1.0) ** -0.5                                      # (D + I)^{-1/2} diagonal
    a_hat = d[:, None] * a_tilde * d[None, :]                    # fold normalization once
    a_hat = jnp.pad(a_hat, ((0, n_pad - n_nodes), (0, n_pad - n_nodes)))
    return a_hat.astype(jnp.bfloat16)                            # stream A_hat as bf16


# ----------------------------------------------------------------------------
# Tiled propagation kernel: out = [relu]( (A_hat @ x) [@ W.T] [+ residual] )
# grid over (row tiles [parallel], reduction tiles [arbitrary]);
# f32 VMEM accumulator; projection / residual / relu fused in finalize.
# ----------------------------------------------------------------------------
def _make_prop_kernel(*, has_w, has_residual, apply_relu):
    def kernel(*refs):
        idx = 0
        a_ref = refs[idx]; idx += 1
        x_ref = refs[idx]; idx += 1
        wt_ref = None
        if has_w:
            wt_ref = refs[idx]; idx += 1
        res_ref = None
        if has_residual:
            res_ref = refs[idx]; idx += 1
        o_ref = refs[idx]; idx += 1
        acc_ref = refs[idx]

        k = pl.program_id(1)

        @pl.when(k == 0)
        def _init():
            acc_ref[...] = jnp.zeros_like(acc_ref)

        # Dominant matmul: bf16 x bf16 -> f32 accumulation on the MXU.
        acc_ref[...] += jnp.dot(a_ref[...], x_ref[...],
                                preferred_element_type=jnp.float32)

        @pl.when(k == pl.num_programs(1) - 1)
        def _finalize():
            out = acc_ref[...]
            if has_w:
                out = jnp.dot(out, wt_ref[...],
                              preferred_element_type=jnp.float32)
            if has_residual:
                out = out + res_ref[...]
            if apply_relu:
                out = jnp.maximum(out, 0.0)
            o_ref[...] = out.astype(o_ref.dtype)

    return kernel


def _propagate_pallas(a_hat, x_bf16, *, wt=None, residual=None,
                      apply_relu=False, out_dtype=jnp.float32):
    """out = [relu]( (A_hat @ x_bf16) [@ wt] [+ residual] ), all operands padded."""
    n_pad = a_hat.shape[0]
    cin_p = x_bf16.shape[1]
    cout_p = wt.shape[1] if wt is not None else cin_p
    tm, tk = _pick_tiles(n_pad)

    in_specs = [
        pl.BlockSpec((tm, tk), lambda i, k: (i, k)),           # A_hat tile
        pl.BlockSpec((tk, cin_p), lambda i, k: (k, 0)),        # x rows of k tile
    ]
    args = [a_hat, x_bf16]
    if wt is not None:
        in_specs.append(pl.BlockSpec((cin_p, cout_p), lambda i, k: (0, 0)))
        args.append(wt)
    if residual is not None:
        in_specs.append(pl.BlockSpec((tm, cout_p), lambda i, k: (i, 0)))
        args.append(residual)

    kernel = _make_prop_kernel(has_w=wt is not None,
                               has_residual=residual is not None,
                               apply_relu=apply_relu)
    return pl.pallas_call(
        kernel,
        out_shape=jax.ShapeDtypeStruct((n_pad, cout_p), out_dtype),
        grid_spec=pltpu.PrefetchScalarGridSpec(
            num_scalar_prefetch=0,
            grid=(n_pad // tm, n_pad // tk),
            in_specs=in_specs,
            out_specs=pl.BlockSpec((tm, cout_p), lambda i, k: (i, 0)),
            scratch_shapes=[pltpu.VMEM((tm, cin_p), jnp.float32)],
        ),
        compiler_params=pltpu.CompilerParams(
            dimension_semantics=("parallel", "arbitrary")),
    )(*args)


# ----------------------------------------------------------------------------
# Small row-parallel projection kernel: out = x @ W.T (used when projecting
# *before* propagation; done once per layer, not per A_hat row tile).
# ----------------------------------------------------------------------------
def _project_kernel(x_ref, wt_ref, o_ref):
    o_ref[...] = jnp.dot(x_ref[...], wt_ref[...],
                         preferred_element_type=jnp.float32).astype(o_ref.dtype)


def _project_pallas(x_bf16, wt, out_dtype=jnp.bfloat16):
    n_pad, cin_p = x_bf16.shape
    cout_p = wt.shape[1]
    tm = 256 if n_pad % 256 == 0 else 128
    return pl.pallas_call(
        _project_kernel,
        out_shape=jax.ShapeDtypeStruct((n_pad, cout_p), out_dtype),
        grid_spec=pltpu.PrefetchScalarGridSpec(
            num_scalar_prefetch=0,
            grid=(n_pad // tm,),
            in_specs=[pl.BlockSpec((tm, cin_p), lambda i: (i, 0)),
                      pl.BlockSpec((cin_p, cout_p), lambda i: (0, 0))],
            out_specs=pl.BlockSpec((tm, cout_p), lambda i: (i, 0)),
        ),
        compiler_params=pltpu.CompilerParams(
            dimension_semantics=("parallel",)),
    )(x_bf16, wt)


def _padded_wt(w):
    c_out, c_in = w.shape
    cin_p = _round_up(c_in, 128)
    cout_p = _round_up(c_out, 128)
    return jnp.zeros((cin_p, cout_p), jnp.float32).at[:c_in, :c_out].set(
        w.T.astype(jnp.float32))


def gcn_conv_pallas(a_hat, h_f32, w, *, residual=None, apply_relu=False):
    """One GCNConv layer (+ optional fused residual-add + ReLU) on padded operands.

    a_hat: [n_pad, n_pad] bf16 (normalized adjacency, pre-folded D^{-1/2})
    h_f32: [n_pad, cin_p] f32  (channel dim padded to a multiple of 128)
    w:     [c_out, c_in]  f32  (nn.Linear convention)
    returns [n_pad, cout_p] f32.
    """
    c_out, c_in = w.shape
    wt = _padded_wt(w)
    h_bf16 = h_f32.astype(jnp.bfloat16)
    if _auto_project_first(c_in, c_out):
        # Project to the narrow width once, then propagate the narrow result.
        xw = _project_pallas(h_bf16, wt, out_dtype=jnp.bfloat16)
        return _propagate_pallas(a_hat, xw, wt=None, residual=residual,
                                 apply_relu=apply_relu)
    return _propagate_pallas(a_hat, h_bf16, wt=wt, residual=residual,
                             apply_relu=apply_relu)


# ----------------------------------------------------------------------------
# Fused multi-layer kernel (small-N fast path): A_hat is DMA'd into VMEM once
# (constant block index across the layer grid) and the activations live in a
# VMEM scratch across layers, so HBM traffic on A is paid once, not per layer.
# ----------------------------------------------------------------------------
def _gcn_fused_kernel(a_ref, x_ref, w_ref, o_ref, h_ref):
    layer = pl.program_id(0)
    n_layers = pl.num_programs(0)

    @pl.when(layer == 0)
    def _load_input():
        h_ref[...] = x_ref[...].astype(jnp.float32)

    h_bf16 = h_ref[...].astype(jnp.bfloat16)
    prop = jnp.dot(a_ref[...], h_bf16, preferred_element_type=jnp.float32)
    new = jnp.dot(prop, w_ref[0], preferred_element_type=jnp.float32)

    @pl.when(layer == 0)
    def _pre():                      # x = relu(pre(x))
        h_ref[...] = jnp.maximum(new, 0.0)

    @pl.when(jnp.logical_and(layer > 0, layer < n_layers - 1))
    def _hidden():                   # x = relu(x + hidden(x))
        h_ref[...] = jnp.maximum(h_ref[...] + new, 0.0)

    @pl.when(layer == n_layers - 1)
    def _out():                      # y = out(x)
        o_ref[...] = new.astype(o_ref.dtype)


def _gcn_forward_fused(a_hat, x, weights, c_out_final):
    n, c_in = x.shape
    n_pad = a_hat.shape[0]
    n_layers = len(weights)
    cp = max(_round_up(c, 128) for w in weights for c in w.shape)

    # Input features streamed as bf16 (first conv quantizes to bf16 anyway).
    x_p = jnp.zeros((n_pad, cp), jnp.bfloat16).at[:n, :c_in].set(
        x.astype(jnp.bfloat16))
    w_stack = jnp.zeros((n_layers, cp, cp), jnp.float32)
    for layer, w in enumerate(weights):
        co, ci = w.shape
        w_stack = w_stack.at[layer, :ci, :co].set(w.T.astype(jnp.float32))

    out = pl.pallas_call(
        _gcn_fused_kernel,
        out_shape=jax.ShapeDtypeStruct((n_pad, cp), jnp.float32),
        grid_spec=pltpu.PrefetchScalarGridSpec(
            num_scalar_prefetch=0,
            grid=(n_layers,),
            in_specs=[
                pl.BlockSpec((n_pad, n_pad), lambda l: (0, 0)),   # A_hat: DMA'd once
                pl.BlockSpec((n_pad, cp), lambda l: (0, 0)),      # input features (bf16)
                pl.BlockSpec((1, cp, cp), lambda l: (l, 0, 0)),   # this layer's W.T
            ],
            out_specs=pl.BlockSpec((n_pad, cp), lambda l: (0, 0)),
            scratch_shapes=[pltpu.VMEM((n_pad, cp), jnp.float32)],  # activations
        ),
        compiler_params=pltpu.CompilerParams(
            dimension_semantics=("arbitrary",),
            vmem_limit_bytes=48 * 1024 * 1024),
    )(a_hat, x_p, w_stack)
    return out[:n, :c_out_final]


def _gcn_forward_tiled(a_hat, x, weights, c_out_final):
    n, c_in = x.shape
    n_pad = a_hat.shape[0]
    cin_p = _round_up(c_in, 128)
    h = jnp.zeros((n_pad, cin_p), jnp.float32).at[:n, :c_in].set(
        x.astype(jnp.float32))

    # x = relu(pre(x))  -- relu fused into the kernel finalize.
    h = gcn_conv_pallas(a_hat, h, weights[0], apply_relu=True)

    # Residual hidden blocks (empty when layers == 2): x = relu(x + hidden(x)),
    # with the residual-add + relu fused into the propagation kernel finalize.
    for w_h in weights[1:-1]:
        h = gcn_conv_pallas(a_hat, h, w_h, residual=h, apply_relu=True)

    out = gcn_conv_pallas(a_hat, h, weights[-1], apply_relu=False)
    return out[:n, :c_out_final]


def gcn_forward(params, x, edge_index, *, force=None):
    """force: None (auto), "fused", or "tiled"."""
    n, _ = x.shape
    n_pad = _round_up(n, 128)
    a_hat = build_graph_operators(edge_index, n, n_pad)
    weights = [params["pre"]] + list(params["hiddens"]) + [params["out"]]
    c_out_final = params["out"].shape[0]

    if force is None:
        cp = max(_round_up(c, 128) for w in weights for c in w.shape)
        est = (2 * n_pad * n_pad * 2        # A_hat bf16, double-buffered
               + 2 * n_pad * cp * 2         # x input (bf16), double-buffered
               + 2 * n_pad * cp * 4         # output block, double-buffered
               + 2 * cp * cp * 4            # weight block, double-buffered
               + n_pad * cp * 4)            # activation scratch
        force = "fused" if est <= _FUSED_VMEM_BUDGET else "tiled"

    if force == "fused":
        return _gcn_forward_fused(a_hat, x, weights, c_out_final)
    return _gcn_forward_tiled(a_hat, x, weights, c_out_final)


# ----------------------------------------------------------------------------
# Parameter init (matches nn.Linear(bias=False) default init).
# ----------------------------------------------------------------------------
def init_linear_weight(key, out_channels, in_channels, dtype=jnp.float32):
    bound = 1.0 / (in_channels ** 0.5)
    return jax.random.uniform(key, (out_channels, in_channels), dtype,
                              minval=-bound, maxval=bound)


def init_gcn_params(key, in_channels, hidden_channels, out_channels, layers=2):
    keys = jax.random.split(key, layers)
    return {
        "pre": init_linear_weight(keys[0], hidden_channels, in_channels),
        "hiddens": [init_linear_weight(keys[1 + i], hidden_channels, hidden_channels)
                    for i in range(layers - 2)],
        "out": init_linear_weight(keys[-1], out_channels, hidden_channels),
    }


# ----------------------------------------------------------------------------
# Pure-JAX reference mirroring the kernels' bf16 quantization points.
# ----------------------------------------------------------------------------
def ref_gcn_forward(params, x, edge_index, *, mirror_tiled):
    n = x.shape[0]
    src, dst = edge_index[0], edge_index[1]
    ones = jnp.ones((edge_index.shape[1],), jnp.float32)
    a = jnp.zeros((n, n), jnp.float32).at[src, dst].add(ones)
    a_tilde = a + jnp.eye(n, dtype=jnp.float32)
    deg = jnp.zeros((n,), jnp.float32).at[src].add(ones)
    d = (deg + 1.0) ** -0.5
    a_hat = (d[:, None] * a_tilde * d[None, :]).astype(jnp.bfloat16).astype(jnp.float32)

    def conv(h, w):
        hb = h.astype(jnp.bfloat16).astype(jnp.float32)
        wt = w.T.astype(jnp.float32)
        if mirror_tiled and _auto_project_first(w.shape[1], w.shape[0]):
            xw = (hb @ wt).astype(jnp.bfloat16).astype(jnp.float32)
            return a_hat @ xw
        return (a_hat @ hb) @ wt

    weights = [params["pre"]] + list(params["hiddens"]) + [params["out"]]
    h = jnp.maximum(conv(x, weights[0]), 0.0)
    for w_h in weights[1:-1]:
        h = jnp.maximum(h + conv(h, w_h), 0.0)
    return conv(h, weights[-1])


if __name__ == "__main__":
    def run_case(case_id, n_nodes, n_edges, c_in, c_hidden, c_out, layers):
        key = jax.random.fold_in(jax.random.PRNGKey(0), case_id)
        k_x, k_e, k_p = jax.random.split(key, 3)
        x = jax.random.normal(k_x, (n_nodes, c_in), dtype=jnp.float32)
        edge_index = jax.random.randint(k_e, (2, n_edges), 0, n_nodes,
                                        dtype=jnp.int32)
        params = init_gcn_params(k_p, c_in, c_hidden, c_out, layers=layers)

        out_fused = jax.block_until_ready(
            gcn_forward(params, x, edge_index, force="fused"))
        out_tiled = jax.block_until_ready(
            gcn_forward(params, x, edge_index, force="tiled"))
        out_auto = jax.block_until_ready(gcn_forward(params, x, edge_index))

        ref_fused = ref_gcn_forward(params, x, edge_index, mirror_tiled=False)
        ref_tiled = ref_gcn_forward(params, x, edge_index, mirror_tiled=True)

        assert out_fused.shape == (n_nodes, c_out)
        assert out_tiled.shape == (n_nodes, c_out)
        assert out_auto.shape == (n_nodes, c_out)
        assert jnp.allclose(out_fused, ref_fused, atol=1e-2, rtol=1e-2), (
            "fused mismatch", case_id,
            float(jnp.max(jnp.abs(out_fused - ref_fused))))
        assert jnp.allclose(out_tiled, ref_tiled, atol=1e-2, rtol=1e-2), (
            "tiled mismatch", case_id,
            float(jnp.max(jnp.abs(out_tiled - ref_tiled))))

    # Small graph matching the module default (layers=2): 16 nodes, 8 -> 32 -> 4.
    run_case(0, n_nodes=16, n_edges=40, c_in=8, c_hidden=32, c_out=4, layers=2)
    # Larger graph exercising multi-tile accumulation, edge padding, a residual
    # hidden block (fused residual-add/relu), and project-first ordering on the
    # 256 -> 4 output layer.
    run_case(1, n_nodes=300, n_edges=900, c_in=8, c_hidden=256, c_out=4, layers=3)

    print("KERNEL_OK")
</pallas_src>

<mosaic_0001>
module attributes {stable_mosaic.version = 11 : i64} {
  func.func @_gcn_fused_kernel(%arg0: i32, %arg1: memref<128x128xbf16, #tpu.memory_space<vmem>>, %arg2: memref<128x128xbf16, #tpu.memory_space<vmem>>, %arg3: memref<1x128x128xf32, #tpu.memory_space<vmem>>, %arg4: memref<128x128xf32, #tpu.memory_space<vmem>>, %arg5: memref<128x128xf32, #tpu.memory_space<vmem>>) attributes {dimension_semantics = [#tpu.dimension_semantics<arbitrary>], iteration_bounds = array<i64: 2>, scalar_prefetch = 0 : i64, scratch_operands = 1 : i64, tpu.core_type = #tpu.core_type<tc>, window_params = [{pipeline_mode = #tpu.pipeline_mode<synchronous>, transform_indices = @transform_0, window_bounds = array<i64: 128, 128>}, {pipeline_mode = #tpu.pipeline_mode<synchronous>, transform_indices = @transform_1, window_bounds = array<i64: 128, 128>}, {transform_indices = @transform_2, window_bounds = array<i64: 1, 128, 128>}, {pipeline_mode = #tpu.pipeline_mode<synchronous>, transform_indices = @transform_3, window_bounds = array<i64: 128, 128>}]} {
    %c0_i32 = arith.constant 0 : i32
    %0 = arith.cmpi eq, %arg0, %c0_i32 : i32
    %1 = arith.extui %0 : i1 to i32
    %c0_i32_0 = arith.constant 0 : i32
    %2 = arith.cmpi ne, %1, %c0_i32_0 : i32
    scf.if %2 {
      %c0_14 = arith.constant 0 : index
      %c0_15 = arith.constant 0 : index
      %21 = vector.load %arg2[%c0_14, %c0_15] : memref<128x128xbf16, #tpu.memory_space<vmem>>, vector<128x128xbf16>
      %22 = arith.extf %21 : vector<128x128xbf16> to vector<128x128xf32>
      %c0_16 = arith.constant 0 : index
      %c0_17 = arith.constant 0 : index
      %23 = vector.load %arg5[%c0_16, %c0_17] : memref<128x128xf32, #tpu.memory_space<vmem>>, vector<128x128xf32>
      tpu.vector_store %arg5[%c0_16, %c0_17], %22 {strides = array<i32>} : memref<128x128xf32, #tpu.memory_space<vmem>>, vector<128x128xf32>,
    } else {
    }
    %c0 = arith.constant 0 : index
    %c0_1 = arith.constant 0 : index
    %3 = vector.load %arg5[%c0, %c0_1] : memref<128x128xf32, #tpu.memory_space<vmem>>, vector<128x128xf32>
    %4 = arith.truncf %3 : vector<128x128xf32> to vector<128x128xbf16>
    %c0_2 = arith.constant 0 : index
    %c0_3 = arith.constant 0 : index
    %5 = vector.load %arg1[%c0_2, %c0_3] : memref<128x128xbf16, #tpu.memory_space<vmem>>, vector<128x128xbf16>
    %cst = arith.constant dense<0.000000e+00> : vector<128x128xf32>
    %6 = tpu.matmul %5, %4, %cst {dimension_numbers = #tpu.dot_dimension_numbers<[1], [0], [0], [1], [0, 0, 1, 1], [], []>} : vector<128x128xbf16>, vector<128x128xbf16>, vector<128x128xf32> -> vector<128x128xf32>
    %c0_4 = arith.constant 0 : index
    %c0_5 = arith.constant 0 : index
    %c0_6 = arith.constant 0 : index
    %7 = vector.load %arg3[%c0_4, %c0_5, %c0_6] : memref<1x128x128xf32, #tpu.memory_space<vmem>>, vector<1x128x128xf32>
    %8 = vector.shape_cast %7 : vector<1x128x128xf32> to vector<128x128xf32>
    %cst_7 = arith.constant dense<0.000000e+00> : vector<128x128xf32>
    %9 = tpu.matmul %6, %8, %cst_7 {dimension_numbers = #tpu.dot_dimension_numbers<[1], [0], [0], [1], [0, 0, 1, 1], [], []>} : vector<128x128xf32>, vector<128x128xf32>, vector<128x128xf32> -> vector<128x128xf32>
    %c0_i32_8 = arith.constant 0 : i32
    %10 = arith.cmpi eq, %arg0, %c0_i32_8 : i32
    %11 = arith.extui %10 : i1 to i32
    %c0_i32_9 = arith.constant 0 : i32
    %12 = arith.cmpi ne, %11, %c0_i32_9 : i32
    scf.if %12 {
      %cst_14 = arith.constant 0.000000e+00 : f32
      %21 = vector.broadcast %cst_14 : f32 to vector<128x128xf32>
      %22 = arith.maximumf %9, %21 : vector<128x128xf32>
      %c0_15 = arith.constant 0 : index
      %c0_16 = arith.constant 0 : index
      %23 = vector.load %arg5[%c0_15, %c0_16] : memref<128x128xf32, #tpu.memory_space<vmem>>, vector<128x128xf32>
      tpu.vector_store %arg5[%c0_15, %c0_16], %22 {strides = array<i32>} : memref<128x128xf32, #tpu.memory_space<vmem>>, vector<128x128xf32>,
    } else {
    }
    %c0_i32_10 = arith.constant 0 : i32
    %13 = arith.cmpi sgt, %arg0, %c0_i32_10 : i32
    %c1_i32 = arith.constant 1 : i32
    %14 = arith.cmpi slt, %arg0, %c1_i32 : i32
    %15 = arith.andi %13, %14 : i1
    %16 = arith.extui %15 : i1 to i32
    %c0_i32_11 = arith.constant 0 : i32
    %17 = arith.cmpi ne, %16, %c0_i32_11 : i32
    scf.if %17 {
      %c0_14 = arith.constant 0 : index
      %c0_15 = arith.constant 0 : index
      %21 = vector.load %arg5[%c0_14, %c0_15] : memref<128x128xf32, #tpu.memory_space<vmem>>, vector<128x128xf32>
      %22 = arith.addf %21, %9 : vector<128x128xf32>
      %cst_16 = arith.constant 0.000000e+00 : f32
      %23 = vector.broadcast %cst_16 : f32 to vector<128x128xf32>
      %24 = arith.maximumf %22, %23 : vector<128x128xf32>
      %c0_17 = arith.constant 0 : index
      %c0_18 = arith.constant 0 : index
      %25 = vector.load %arg5[%c0_17, %c0_18] : memref<128x128xf32, #tpu.memory_space<vmem>>, vector<128x128xf32>
      tpu.vector_store %arg5[%c0_17, %c0_18], %24 {strides = array<i32>} : memref<128x128xf32, #tpu.memory_space<vmem>>, vector<128x128xf32>,
    } else {
    }
    %c1_i32_12 = arith.constant 1 : i32
    %18 = arith.cmpi eq, %arg0, %c1_i32_12 : i32
    %19 = arith.extui %18 : i1 to i32
    %c0_i32_13 = arith.constant 0 : i32
    %20 = arith.cmpi ne, %19, %c0_i32_13 : i32
    scf.if %20 {
      %c0_14 = arith.constant 0 : index
      %c0_15 = arith.constant 0 : index
      %21 = vector.load %arg4[%c0_14, %c0_15] : memref<128x128xf32, #tpu.memory_space<vmem>>, vector<128x128xf32>
      tpu.vector_store %arg4[%c0_14, %c0_15], %9 {strides = array<i32>} : memref<128x128xf32, #tpu.memory_space<vmem>>, vector<128x128xf32>,
    } else {
    }
    return
  }
  func.func @transform_0(%arg0: i32) -> (i32, i32) {
    %c0_i32 = arith.constant 0 : i32
    %c0_i32_0 = arith.constant 0 : i32
    %c0_i32_1 = arith.constant 0 : i32
    return %c0_i32, %c0_i32_0 : i32, i32
  }
  func.func @transform_1(%arg0: i32) -> (i32, i32) {
    %c0_i32 = arith.constant 0 : i32
    %c0_i32_0 = arith.constant 0 : i32
    %c0_i32_1 = arith.constant 0 : i32
    return %c0_i32, %c0_i32_0 : i32, i32
  }
  func.func @transform_2(%arg0: i32) -> (i32, i32, i32) {
    %c0_i32 = arith.constant 0 : i32
    %c0_i32_0 = arith.constant 0 : i32
    %c0_i32_1 = arith.constant 0 : i32
    return %arg0, %c0_i32, %c0_i32_0 : i32, i32, i32
  }
  func.func @transform_3(%arg0: i32) -> (i32, i32) {
    %c0_i32 = arith.constant 0 : i32
    %c0_i32_0 = arith.constant 0 : i32
    %c0_i32_1 = arith.constant 0 : i32
    return %c0_i32, %c0_i32_0 : i32, i32
  }
}

</mosaic_0001>

<llo_original>
// kernel: tpu_custom_call.1
$region0: #{tpu_custom_call.1}
  #allocation0 [shape = 'u32[]', space=smem, size = 0x4, offset = 0x4, fixed_abs, tag = 'smem constant byte address 0x4 - core index']
  #allocation1 [shape = 'u32[144,128]{1,0:T(1,128)}', space=vmem, size = 0x12000, scoped, tag = 'internal scratch']
  #allocation2 [shape = 'f32[128,128]{1,0:T(8,128)}', space=vmem, size = 0x10000, scoped, tag = 'scratch operand']
  %s0 = inlined_call_operand.hbm [shape: bf16[128,128], index: 0, kind: input, shape index: {}]
  %s1 = inlined_call_operand.hbm [shape: bf16[128,128], index: 1, kind: input, shape index: {}]
  %s2 = inlined_call_operand.hbm [shape: f32[2,128,128], index: 2, kind: input, shape index: {}]
  %s3 = inlined_call_operand.hbm [shape: f32[128,128], index: 3, kind: output, shape index: {}]
  %s4 = sld [smem:[#allocation0]]
  $region73: #{tpu_custom_call.1} parent=0
    _
  %s6 = ssub.s32 1, %s4
  %s7 = scalar_select 0, %s6, %s4
  $region1: #{tpu_custom_call.1} parent=0
    #allocation3 [shape = 'u8[32768]{0}', space=vmem, size = 0x8000, scoped, tag = 'input window, operand 0, single buffered']
    #allocation4 [shape = 's32[2]{0}', space=sflag, size = 0x8, scoped, tag = 'scoped memory for tpu_custom_call.1']
    #allocation5 [shape = 's32[2]{0}', space=sflag, size = 0x8, scoped, tag = 'scoped memory for tpu_custom_call.1']
    #allocation6 [shape = 'u8[32768]{0}', space=vmem, size = 0x8000, scoped, tag = 'input window, operand 1, single buffered']
    #allocation7 [shape = 's32[1]{0}', space=sflag, size = 0x4, scoped, tag = 'scoped memory for tpu_custom_call.1']
    #allocation8 [shape = 'u8[131072]{0}', space=vmem, size = 0x20000, scoped, tag = 'input window, operand 2']
    #allocation9 [shape = 'u8[65536]{0}', space=vmem, size = 0x10000, scoped, tag = 'output window, operand 0, single buffered']
    %8 = vsyncpa [#allocation4], 0
    %9 = vsyncpa [#allocation7], 0
    %10 = vsyncpa [#allocation5], 0
    loop: start=0, step=1, limit=4
    $region2: #{tpu_custom_call.1} parent=1 // loop_pre_header
      _
    $region3: #{tpu_custom_call.1} parent=1 // loop_header
      %s12 = sphi 0, %s16
      %p13 = scmp.ge.s32.totalorder %s12, 4
      %s20 = sphi 0, %s20
      %s22 = sphi 0, %s20
      %s23 = sphi 0, %s22
      %s37 = sphi 0, %s23
      %s41 = sphi 0, %s41
      %s43 = sphi 0, %s41
      %s44 = sphi 0, %s43
      %s58 = sphi 0, %s44
      %s64 = sphi 0, %s66
      %s67 = sphi 0, %s64
      %s68 = sphi 0, %s67
      %s84 = sphi 0, %s68
      %s88 = sphi 0, %s88
      %s90 = sphi 0, %s88
      %s91 = sphi 0, %s90
      %s105 = sphi 0, %s91
    $region4: #{tpu_custom_call.1} parent=1 // loop_header_branch
      %15 = sbr.rel (%p13) target = $region8
    $region5: #{tpu_custom_call.1} parent=1 // loop_body
      %s17 = ssub.s32 %s12, 1
      %s18 = ssub.s32 %s12, 2
      %s19 = sadd.s32 %s12, 1
      %s21 = sadd.s32 %s20, 1
      %p24 = scmp.eq.s32.totalorder %s12, 1
      %p25 = scmp.ne.s32.totalorder %s20, %s22
      %p26 = scmp.eq.s32.totalorder %s12, 0
      %p27 = por %p25, %p26
      %p28 = scmp.ne.s32.totalorder %s20, %s22
      %p29 = scmp.eq.s32.totalorder %s17, 1
      %p30 = por %p28, %p29
      %p31 = scmp.ne.s32.totalorder %s22, %s23
      %p32 = scmp.eq.s32.totalorder %s17, 0
      %p33 = por %p31, %p32
      %p34 = scmp.ne.s32.totalorder %s22, %s23
      %p35 = scmp.eq.s32.totalorder %s18, 1
      %p36 = por %p34, %p35
      %p38 = scmp.ne.s32.totalorder %s23, %s37
      %p39 = scmp.eq.s32.totalorder %s18, 0
      %p40 = por %p38, %p39
      %s42 = sadd.s32 %s41, 1
      %p45 = scmp.eq.s32.totalorder %s12, 1
      %p46 = scmp.ne.s32.totalorder %s41, %s43
      %p47 = scmp.eq.s32.totalorder %s12, 0
      %p48 = por %p46, %p47
      %p49 = scmp.ne.s32.totalorder %s41, %s43
      %p50 = scmp.eq.s32.totalorder %s17, 1
      %p51 = por %p49, %p50
      %p52 = scmp.ne.s32.totalorder %s43, %s44
      %p53 = scmp.eq.s32.totalorder %s17, 0
      %p54 = por %p52, %p53
      %p55 = scmp.ne.s32.totalorder %s43, %s44
      %p56 = scmp.eq.s32.totalorder %s18, 1
      %p57 = por %p55, %p56
      %p59 = scmp.ne.s32.totalorder %s44, %s58
      %p60 = scmp.eq.s32.totalorder %s18, 0
      %p61 = por %p59, %p60
      %s62 = ssub.s32 %s12, %s19
      %p63 = scmp.eq.s32.totalorder %s62, 0
      %s65 = sadd.s32 %s64, 1
      %s66 = scalar_select %p63, %s64, %s65
      %p69 = pneg %p63
      %p70 = scmp.eq.s32.totalorder %s12, 1
      %p71 = por %p69, %p70
      %p72 = scmp.ne.s32.totalorder %s64, %s67
      %p73 = scmp.eq.s32.totalorder %s12, 0
      %p74 = por %p72, %p73
      %p75 = scmp.ne.s32.totalorder %s64, %s67
      %p76 = scmp.eq.s32.totalorder %s17, 1
      %p77 = por %p75, %p76
      %p78 = scmp.ne.s32.totalorder %s67, %s68
      %p79 = scmp.eq.s32.totalorder %s17, 0
      %p80 = por %p78, %p79
      %p81 = scmp.ne.s32.totalorder %s67, %s68
      %p82 = scmp.eq.s32.totalorder %s18, 1
      %p83 = por %p81, %p82
      %p85 = scmp.ne.s32.totalorder %s68, %s84
      %p86 = scmp.eq.s32.totalorder %s18, 0
      %p87 = por %p85, %p86
      %s89 = sadd.s32 %s88, 1
      %p92 = scmp.eq.s32.totalorder %s12, 1
      %p93 = scmp.ne.s32.totalorder %s88, %s90
      %p94 = scmp.eq.s32.totalorder %s12, 0
      %p95 = por %p93, %p94
      %p96 = scmp.ne.s32.totalorder %s88, %s90
      %p97 = scmp.eq.s32.totalorder %s17, 1
      %p98 = por %p96, %p97
      %p99 = scmp.ne.s32.totalorder %s90, %s91
      %p100 = scmp.eq.s32.totalorder %s17, 0
      %p101 = por %p99, %p100
      %p102 = scmp.ne.s32.totalorder %s90, %s91
      %p103 = scmp.eq.s32.totalorder %s18, 1
      %p104 = por %p102, %p103
      %p106 = scmp.ne.s32.totalorder %s91, %s105
      %p107 = scmp.eq.s32.totalorder %s18, 0
      %p108 = por %p106, %p107
      %p109 = scmp.le.s32.totalorder 1, %s12
      %p110 = scmp.lt.s32.totalorder %s12, 3
      %p111 = pnand %p109, %p110
      %p112 = pneg %p111
      // Predicated region
      $region9: #{tpu_custom_call.1} parent=5 // pred_check
        _
      $region10: #{tpu_custom_call.1} parent=5 // pred_check_branch
        %114 = sbr.rel (%p111) target = $region12
      $region11: #{tpu_custom_call.1} parent=5 // pred_region
        %s115 = ssub.s32 %s12, 1
        // Predicated region
        $region13: #{tpu_custom_call.1} parent=11 // pred_check
          %p116 = pneg %p33
        $region14: #{tpu_custom_call.1} parent=11 // pred_check_branch
          %118 = sbr.rel (%p116) target = $region16
        $region15: #{tpu_custom_call.1} parent=11 // pred_region
          %s120 = ssub.s32 1024, 1024
          %121 = vsyncadd [#allocation4], %s120
          %s122 = sshll.u32 [#allocation3], 4
          %s123 = int_to_ptr.vmem [resolvable:$true] %s122
          %128 = dma.hbm_to_vmem [thread:$0]  %s0, 1024, %s123, [#allocation4], 64, 64, 4
        $region16: #{tpu_custom_call.1} parent=11 // pred_fallthru
          _
        // Predicated region
        $region17: #{tpu_custom_call.1} parent=11 // pred_check
          %p129 = pneg %p54
        $region18: #{tpu_custom_call.1} parent=11 // pred_check_branch
          %131 = sbr.rel (%p129) target = $region20
        $region19: #{tpu_custom_call.1} parent=11 // pred_region
          %s133 = ssub.s32 1024, 1024
          %134 = vsyncadd [#allocation7], %s133
          %s135 = sshll.u32 [#allocation6], 4
          %s136 = int_to_ptr.vmem [resolvable:$true] %s135
          %141 = dma.hbm_to_vmem [thread:$0]  %s1, 1024, %s136, [#allocation7], 64, 64, 4
        $region20: #{tpu_custom_call.1} parent=11 // pred_fallthru
          _
      $region12: #{tpu_custom_call.1} parent=5 // pred_fallthru
        _
      %p142 = scmp.lt.s32.totalorder %s12, 2
      // Predicated region
      $region21: #{tpu_custom_call.1} parent=5 // pred_check
        %p143 = pneg %p142
      $region22: #{tpu_custom_call.1} parent=5 // pred_check_branch
        %145 = sbr.rel (%p143) target = $region24
      $region23: #{tpu_custom_call.1} parent=5 // pred_region
        // Predicated region
        $region25: #{tpu_custom_call.1} parent=23 // pred_check
          %p146 = pneg %p74
        $region26: #{tpu_custom_call.1} parent=23 // pred_check_branch
          %148 = sbr.rel (%p146) target = $region28
        $region27: #{tpu_custom_call.1} parent=23 // pred_region
          %s149 = sand.u32 %s12, 1
          %s150 = scalar_lea.sflag [#allocation4], %s149
          %s151 = sand.u32 %s64, 1
          %s152 = smul.addr %s151, 128
          %s153 = scalar_lea.vmem [#allocation8], %s152
          %s155 = ssub.s32 2048, 2048
          %156 = vsyncadd %s150, %s155
          %s157 = smul.addr %s12, 16
          %s158 = smul.addr %s157, 128
          %s159 = scalar_lea.hbm %s2, %s158
          %s160 = sshll.u32 %s153, 4
          %s161 = int_to_ptr.vmem [resolvable:$true] %s160
          %166 = dma.hbm_to_vmem [thread:$0]  %s159, 2048, %s161, %s150, 128, 128, 8
        $region28: #{tpu_custom_call.1} parent=23 // pred_fallthru
          _
      $region24: #{tpu_custom_call.1} parent=5 // pred_fallthru
        _
      %p167 = scmp.le.s32.totalorder 1, %s12
      %p168 = scmp.lt.s32.totalorder %s12, 3
      %p169 = pnand %p167, %p168
      %p170 = pneg %p169
      // Predicated region
      $region29: #{tpu_custom_call.1} parent=5 // pred_check
        _
      $region30: #{tpu_custom_call.1} parent=5 // pred_check_branch
        %172 = sbr.rel (%p169) target = $region32
      $region31: #{tpu_custom_call.1} parent=5 // pred_region
        %s173 = ssub.s32 %s12, 1
        // Predicated region
        $region33: #{tpu_custom_call.1} parent=31 // pred_check
          %p174 = pneg %p33
        $region34: #{tpu_custom_call.1} parent=31 // pred_check_branch
          %176 = sbr.rel (%p174) target = $region36
        $region35: #{tpu_custom_call.1} parent=31 // pred_region
          %177 = dma.done [#allocation4], 1024
        $region36: #{tpu_custom_call.1} parent=31 // pred_fallthru
          _
        // Predicated region
        $region37: #{tpu_custom_call.1} parent=31 // pred_check
          %p178 = pneg %p54
        $region38: #{tpu_custom_call.1} parent=31 // pred_check_branch
          %180 = sbr.rel (%p178) target = $region40
        $region39: #{tpu_custom_call.1} parent=31 // pred_region
          %181 = dma.done [#allocation7], 1024
        $region40: #{tpu_custom_call.1} parent=31 // pred_fallthru
          _
        %s182 = sand.u32 %s17, 1
        %s183 = scalar_lea.sflag [#allocation4], %s182
        %s184 = sand.u32 %s67, 1
        %s185 = smul.addr %s184, 128
        %s186 = scalar_lea.vmem [#allocation8], %s185
        // Predicated region
        $region41: #{tpu_custom_call.1} parent=31 // pred_check
          %p187 = pneg %p80
        $region42: #{tpu_custom_call.1} parent=31 // pred_check_branch
          %189 = sbr.rel (%p187) target = $region44
        $region43: #{tpu_custom_call.1} parent=31 // pred_region
          %190 = dma.done %s183, 2048
        $region44: #{tpu_custom_call.1} parent=31 // pred_fallthru
          _
        %p191 = pneg %p33
        %p192 = pneg %p30
        %p193 = pneg %p54
        %p194 = pneg %p51
        %s195 = sand.u32 %s17, 1
        %s196 = scalar_lea.sflag [#allocation4], %s195
        %s197 = sand.u32 %s67, 1
        %s198 = smul.addr %s197, 128
        %s199 = scalar_lea.vmem [#allocation8], %s198
        %p200 = pneg %p80
        %p201 = pneg %p77
        %p202 = pneg %p101
        %p203 = pneg %p98
        %p205 = scmp.eq.s32.totalorder %s17, 0
        // Predicated region
        $region45: #{tpu_custom_call.1} parent=31 // pred_check
          %p206 = pneg %p205
        $region46: #{tpu_custom_call.1} parent=31 // pred_check_branch
          %208 = sbr.rel (%p206) target = $region48
        $region47: #{tpu_custom_call.1} parent=31 // pred_region
          %v209 = vld [vmem:[#allocation6] sm:$0xf]
          %v210 = vld [vmem:[#allocation6 + $0x4] sm:$0xf]
          %v211 = vld [vmem:[#allocation6 + $0x8] sm:$0xf]
          %v212 = vld [vmem:[#allocation6 + $0xc] sm:$0xf]
          %v213 = vld [vmem:[#allocation6 + $0x10] sm:$0xf]
          %v214 = vld [vmem:[#allocation6 + $0x14] sm:$0xf]
          %v215 = vld [vmem:[#allocation6 + $0x18] sm:$0xf]
          %v216 = vld [vmem:[#allocation6 + $0x1c] sm:$0xf]
          %v217 = vld [vmem:[#allocation6 + $0x20] sm:$0xf]
          %v218 = vld [vmem:[#allocation6 + $0x24] sm:$0xf]
          %v219 = vld [vmem:[#allocation6 + $0x28] sm:$0xf]
          %v220 = vld [vmem:[#allocation6 + $0x2c] sm:$0xf]
          %v221 = vld [vmem:[#allocation6 + $0x30] sm:$0xf]
          %v222 = vld [vmem:[#allocation6 + $0x34] sm:$0xf]
          %v223 = vld [vmem:[#allocation6 + $0x38] sm:$0xf]
          %v224 = vld [vmem:[#allocation6 + $0x3c] sm:$0xf]
          %v225 = vunpack.c.l.bf16 %v209
          %v226 = vunpack.c.l.bf16 %v210
          %v227 = vunpack.c.l.bf16 %v211
          %v228 = vunpack.c.l.bf16 %v212
          %v229 = vunpack.c.l.bf16 %v213
          %v230 = vunpack.c.l.bf16 %v214
          %v231 = vunpack.c.l.bf16 %v215
          %v232 = vunpack.c.l.bf16 %v216
          %v233 = vunpack.c.l.bf16 %v217
          %v234 = vunpack.c.l.bf16 %v218
          %v235 = vunpack.c.l.bf16 %v219
          %v236 = vunpack.c.l.bf16 %v220
          %v237 = vunpack.c.l.bf16 %v221
          %v238 = vunpack.c.l.bf16 %v222
          %v239 = vunpack.c.l.bf16 %v223
          %v240 = vunpack.c.l.bf16 %v224
          %241 = vst [vmem:[#allocation2] sm:$0xff] %v225
          %242 = vst [vmem:[#allocation2 + $0x8] sm:$0xff] %v226
          %243 = vst [vmem:[#allocation2 + $0x10] sm:$0xff] %v227
          %244 = vst [vmem:[#allocation2 + $0x18] sm:$0xff] %v228
          %245 = vst [vmem:[#allocation2 + $0x20] sm:$0xff] %v229
          %246 = vst [vmem:[#allocation2 + $0x28] sm:$0xff] %v230
          %247 = vst [vmem:[#allocation2 + $0x30] sm:$0xff] %v231
          %248 = vst [vmem:[#allocation2 + $0x38] sm:$0xff] %v232
          %249 = vst [vmem:[#allocation2 + $0x40] sm:$0xff] %v233
          %250 = vst [vmem:[#allocation2 + $0x48] sm:$0xff] %v234
          %251 = vst [vmem:[#allocation2 + $0x50] sm:$0xff] %v235
          %252 = vst [vmem:[#allocation2 + $0x58] sm:$0xff] %v236
          %253 = vst [vmem:[#allocation2 + $0x60] sm:$0xff] %v237
          %254 = vst [vmem:[#allocation2 + $0x68] sm:$0xff] %v238
          %255 = vst [vmem:[#allocation2 + $0x70] sm:$0xff] %v239
          %256 = vst [vmem:[#allocation2 + $0x78] sm:$0xff] %v240
        $region48: #{tpu_custom_call.1} parent=31 // pred_fallthru
          _
        %v257 = vld [vmem:[#allocation2] sm:$0xff]
        %v258 = vld [vmem:[#allocation2 + $0x8] sm:$0xff]
        %v259 = vld [vmem:[#allocation2 + $0x10] sm:$0xff]
        %v260 = vld [vmem:[#allocation2 + $0x18] sm:$0xff]
        %v261 = vld [vmem:[#allocation2 + $0x20] sm:$0xff]
        %v262 = vld [vmem:[#allocation2 + $0x28] sm:$0xff]
        %v263 = vld [vmem:[#allocation2 + $0x30] sm:$0xff]
        %v264 = vld [vmem:[#allocation2 + $0x38] sm:$0xff]
        %v265 = vld [vmem:[#allocation2 + $0x40] sm:$0xff]
        %v266 = vld [vmem:[#allocation2 + $0x48] sm:$0xff]
        %v267 = vld [vmem:[#allocation2 + $0x50] sm:$0xff]
        %v268 = vld [vmem:[#allocation2 + $0x58] sm:$0xff]
        %v269 = vld [vmem:[#allocation2 + $0x60] sm:$0xff]
        %v270 = vld [vmem:[#allocation2 + $0x68] sm:$0xff]
        %v271 = vld [vmem:[#allocation2 + $0x70] sm:$0xff]
        %v272 = vld [vmem:[#allocation2 + $0x78] sm:$0xff]
        %v273 = vpack.c.bf16 %v258, %v257
        %v274 = vpack.c.bf16 %v260, %v259
        %v275 = vpack.c.bf16 %v262, %v261
        %v276 = vpack.c.bf16 %v264, %v263
        %v277 = vpack.c.bf16 %v266, %v265
        %v278 = vpack.c.bf16 %v268, %v267
        %v279 = vpack.c.bf16 %v270, %v269
        %v280 = vpack.c.bf16 %v272, %v271
        %v281 = vld [vmem:[#allocation3] sm:$0xf]
        %v282 = vld [vmem:[#allocation3 + $0x4] sm:$0xf]
        %v283 = vld [vmem:[#allocation3 + $0x8] sm:$0xf]
        %v284 = vld [vmem:[#allocation3 + $0xc] sm:$0xf]
        %v285 = vld [vmem:[#allocation3 + $0x10] sm:$0xf]
        %v286 = vld [vmem:[#allocation3 + $0x14] sm:$0xf]
        %v287 = vld [vmem:[#allocation3 + $0x18] sm:$0xf]
        %v288 = vld [vmem:[#allocation3 + $0x1c] sm:$0xf]
        %v289 = vld [vmem:[#allocation3 + $0x20] sm:$0xf]
        %v290 = vld [vmem:[#allocation3 + $0x24] sm:$0xf]
        %v291 = vld [vmem:[#allocation3 + $0x28] sm:$0xf]
        %v292 = vld [vmem:[#allocation3 + $0x2c] sm:$0xf]
        %v293 = vld [vmem:[#allocation3 + $0x30] sm:$0xf]
        %v294 = vld [vmem:[#allocation3 + $0x34] sm:$0xf]
        %v295 = vld [vmem:[#allocation3 + $0x38] sm:$0xf]
        %v296 = vld [vmem:[#allocation3 + $0x3c] sm:$0xf]
        %v313 = vunpack.c.l.b16 %v281
        %v314 = vunpack.c.l.b16 %v282
        %v315 = vunpack.c.l.b16 %v283
        %v316 = vunpack.c.l.b16 %v284
        %v317 = vunpack.c.l.b16 %v285
        %v318 = vunpack.c.l.b16 %v286
        %v319 = vunpack.c.l.b16 %v287
        %v320 = vunpack.c.l.b16 %v288
        %v321 = vunpack.c.l.b16 %v289
        %v322 = vunpack.c.l.b16 %v290
        %v323 = vunpack.c.l.b16 %v291
        %v324 = vunpack.c.l.b16 %v292
        %v325 = vunpack.c.l.b16 %v293
        %v326 = vunpack.c.l.b16 %v294
        %v327 = vunpack.c.l.b16 %v295
        %v328 = vunpack.c.l.b16 %v296
        %v329 = vpack.c.b16 %v314, %v313
        %v330 = vpack.c.b16 %v316, %v315
        %v331 = vpack.c.b16 %v318, %v317
        %v332 = vpack.c.b16 %v320, %v319
        %v333 = vpack.c.b16 %v322, %v321
        %v334 = vpack.c.b16 %v324, %v323
        %v335 = vpack.c.b16 %v326, %v325
        %v336 = vpack.c.b16 %v328, %v327
        %345 = vmatprep.subr.bf16.mxu0 0
        %346 = vmatpush1.bf16.msra.mxu0 %v273
        %347 = vmatprep.subr.bf16.mxu0 0
        %348 = vmatpush1.bf16.msra.mxu0 %v274
        %349 = vmatprep.subr.bf16.mxu0 0
        %350 = vmatpush1.bf16.msra.mxu0 %v275
        %351 = vmatprep.subr.bf16.mxu0 0
        %352 = vmatpush1.bf16.msra.mxu0 %v276
        %353 = vmatprep.subr.bf16.mxu0 0
        %354 = vmatpush1.bf16.msra.mxu0 %v277
        %355 = vmatprep.subr.bf16.mxu0 0
        %356 = vmatpush1.bf16.msra.mxu0 %v278
        %357 = vmatprep.subr.bf16.mxu0 0
        %358 = vmatpush1.bf16.msra.mxu0 %v279
        %359 = vmatprep.subr.bf16.mxu0 0
        %360 = vmatpush1.bf16.msra.mxu0 %v280
        %361 = vmatprep.subr.bf16.mxu0 0
        %362 = vmatpush1.bf16.msra.mxu0 0
        %363 = vmatprep.subr.bf16.mxu0 0
        %364 = vmatpush1.bf16.msra.mxu0 0
        %365 = vmatprep.subr.bf16.mxu0 0
        %366 = vmatpush1.bf16.msra.mxu0 0
        %367 = vmatprep.subr.bf16.mxu0 0
        %368 = vmatpush1.bf16.msra.mxu0 0
        %369 = vmatprep.subr.bf16.mxu0 0
        %370 = vmatpush1.bf16.msra.mxu0 0
        %371 = vmatprep.subr.bf16.mxu0 0
        %372 = vmatpush1.bf16.msra.mxu0 0
        %373 = vmatprep.subr.bf16.mxu0 0
        %374 = vmatpush1.bf16.msra.mxu0 0
        %375 = vmatprep.subr.bf16.mxu0 0
        %376 = vmatpush1.bf16.msra.mxu0 0
        %377 = vmatprep.mubr.bf16.mxu0 0
        %378 = vmatmul.mubr.bf16.gmra.mrb[0].mxu0 %v329
        %v379 = vpop.f32.mrb[0].mxu0
        %v380 = vadd.f32 0.0, %v379
        %v381 = vpop.f32.mrb[0].mxu0
        %v382 = vpop.f32.mrb[0].mxu0
        %v383 = vadd.f32 0.0, %v382
        %v384 = vpop.f32.mrb[0].mxu0
        %385 = vmatprep.mubr.bf16.mxu0 0
        %386 = vmatmul.mubr.bf16.gmra.mrb[0].mxu0 %v330
        %v387 = vpop.f32.mrb[0].mxu0
        %v388 = vadd.f32 0.0, %v387
        %v389 = vpop.f32.mrb[0].mxu0
        %v390 = vpop.f32.mrb[0].mxu0
        %v391 = vadd.f32 0.0, %v390
        %v392 = vpop.f32.mrb[0].mxu0
        %393 = vmatprep.mubr.bf16.mxu0 0
        %394 = vmatmul.mubr.bf16.gmra.mrb[0].mxu0 %v331
        %v395 = vpop.f32.mrb[0].mxu0
        %v396 = vadd.f32 0.0, %v395
        %v397 = vpop.f32.mrb[0].mxu0
        %v398 = vpop.f32.mrb[0].mxu0
        %v399 = vadd.f32 0.0, %v398
        %v400 = vpop.f32.mrb[0].mxu0
        %401 = vmatprep.mubr.bf16.mxu0 0
        %402 = vmatmul.mubr.bf16.gmra.mrb[0].mxu0 %v332
        %v403 = vpop.f32.mrb[0].mxu0
        %v404 = vadd.f32 0.0, %v403
        %v405 = vpop.f32.mrb[0].mxu0
        %v406 = vpop.f32.mrb[0].mxu0
        %v407 = vadd.f32 0.0, %v406
        %v408 = vpop.f32.mrb[0].mxu0
        %409 = vmatprep.mubr.bf16.mxu0 0
        %410 = vmatmul.mubr.bf16.gmra.mrb[0].mxu0 %v333
        %v411 = vpop.f32.mrb[0].mxu0
        %v412 = vadd.f32 0.0, %v411
        %v413 = vpop.f32.mrb[0].mxu0
        %v414 = vpop.f32.mrb[0].mxu0
        %v415 = vadd.f32 0.0, %v414
        %v416 = vpop.f32.mrb[0].mxu0
        %417 = vmatprep.mubr.bf16.mxu0 0
        %418 = vmatmul.mubr.bf16.gmra.mrb[0].mxu0 %v334
        %v419 = vpop.f32.mrb[0].mxu0
        %v420 = vadd.f32 0.0, %v419
        %v421 = vpop.f32.mrb[0].mxu0
        %v422 = vpop.f32.mrb[0].mxu0
        %v423 = vadd.f32 0.0, %v422
        %v424 = vpop.f32.mrb[0].mxu0
        %425 = vmatprep.mubr.bf16.mxu0 0
        %426 = vmatmul.mubr.bf16.gmra.mrb[0].mxu0 %v335
        %v427 = vpop.f32.mrb[0].mxu0
        %v428 = vadd.f32 0.0, %v427
        %v429 = vpop.f32.mrb[0].mxu0
        %v430 = vpop.f32.mrb[0].mxu0
        %v431 = vadd.f32 0.0, %v430
        %v432 = vpop.f32.mrb[0].mxu0
        %433 = vmatprep.mubr.bf16.mxu0 0
        %434 = vmatmul.mubr.bf16.gmra.mrb[0].mxu0 %v336
        %v435 = vpop.f32.mrb[0].mxu0
        %v436 = vadd.f32 0.0, %v435
        %v437 = vpop.f32.mrb[0].mxu0
        %v438 = vpop.f32.mrb[0].mxu0
        %v439 = vadd.f32 0.0, %v438
        %v440 = vpop.f32.mrb[0].mxu0
        %441 = vdwg.mxu0
        %v442 = vld [vmem:[%s186] sm:$0xff]
        %v443 = vld [vmem:[%s186 + $0x8] sm:$0xff]
        %v444 = vld [vmem:[%s186 + $0x10] sm:$0xff]
        %v445 = vld [vmem:[%s186 + $0x18] sm:$0xff]
        %v446 = vld [vmem:[%s186 + $0x20] sm:$0xff]
        %v447 = vld [vmem:[%s186 + $0x28] sm:$0xff]
        %v448 = vld [vmem:[%s186 + $0x30] sm:$0xff]
        %v449 = vld [vmem:[%s186 + $0x38] sm:$0xff]
        %v450 = vld [vmem:[%s186 + $0x40] sm:$0xff]
        %v451 = vld [vmem:[%s186 + $0x48] sm:$0xff]
        %v452 = vld [vmem:[%s186 + $0x50] sm:$0xff]
        %v453 = vld [vmem:[%s186 + $0x58] sm:$0xff]
        %v454 = vld [vmem:[%s186 + $0x60] sm:$0xff]
        %v455 = vld [vmem:[%s186 + $0x68] sm:$0xff]
        %v456 = vld [vmem:[%s186 + $0x70] sm:$0xff]
        %v457 = vld [vmem:[%s186 + $0x78] sm:$0xff]
        %458 = vmatprep.subr.mxu0 0.0
        %459 = vmatpush1.msra.mxu0 %v442
        %460 = vmatprep.subr.mxu0 0.0
        %461 = vmatpush1.msra.mxu0 %v443
        %462 = vmatprep.subr.mxu0 0.0
        %463 = vmatpush1.msra.mxu0 %v444
        %464 = vmatprep.subr.mxu0 0.0
        %465 = vmatpush1.msra.mxu0 %v445
        %466 = vmatprep.subr.mxu0 0.0
        %467 = vmatpush1.msra.mxu0 %v446
        %468 = vmatprep.subr.mxu0 0.0
        %469 = vmatpush1.msra.mxu0 %v447
        %470 = vmatprep.subr.mxu0 0.0
        %471 = vmatpush1.msra.mxu0 %v448
        %472 = vmatprep.subr.mxu0 0.0
        %473 = vmatpush1.msra.mxu0 %v449
        %474 = vmatprep.subr.mxu0 0.0
        %475 = vmatpush1.msra.mxu0 %v450
        %476 = vmatprep.subr.mxu0 0.0
        %477 = vmatpush1.msra.mxu0 %v451
        %478 = vmatprep.subr.mxu0 0.0
        %479 = vmatpush1.msra.mxu0 %v452
        %480 = vmatprep.subr.mxu0 0.0
        %481 = vmatpush1.msra.mxu0 %v453
        %482 = vmatprep.subr.mxu0 0.0
        %483 = vmatpush1.msra.mxu0 %v454
        %484 = vmatprep.subr.mxu0 0.0
        %485 = vmatpush1.msra.mxu0 %v455
        %486 = vmatprep.subr.mxu0 0.0
        %487 = vmatpush1.msra.mxu0 %v456
        %488 = vmatprep.subr.mxu0 0.0
        %489 = vmatpush1.msra.mxu0 %v457
        %490 = vmatprep.subr.mxu0 0.0
        %491 = vmatpush1.msra.mxu0 0.0
        %492 = vmatprep.subr.mxu0 0.0
        %493 = vmatpush1.msra.mxu0 0.0
        %494 = vmatprep.subr.mxu0 0.0
        %495 = vmatpush1.msra.mxu0 0.0
        %496 = vmatprep.subr.mxu0 0.0
        %497 = vmatpush1.msra.mxu0 0.0
        %498 = vmatprep.subr.mxu0 0.0
        %499 = vmatpush1.msra.mxu0 0.0
        %500 = vmatprep.subr.mxu0 0.0
        %501 = vmatpush1.msra.mxu0 0.0
        %502 = vmatprep.subr.mxu0 0.0
        %503 = vmatpush1.msra.mxu0 0.0
        %504 = vmatprep.subr.mxu0 0.0
        %505 = vmatpush1.msra.mxu0 0.0
        %506 = vmatprep.subr.mxu0 0.0
        %507 = vmatpush1.msra.mxu0 0.0
        %508 = vmatprep.subr.mxu0 0.0
        %509 = vmatpush1.msra.mxu0 0.0
        %510 = vmatprep.subr.mxu0 0.0
        %511 = vmatpush1.msra.mxu0 0.0
        %512 = vmatprep.subr.mxu0 0.0
        %513 = vmatpush1.msra.mxu0 0.0
        %514 = vmatprep.subr.mxu0 0.0
        %515 = vmatpush1.msra.mxu0 0.0
        %516 = vmatprep.subr.mxu0 0.0
        %517 = vmatpush1.msra.mxu0 0.0
        %518 = vmatprep.subr.mxu0 0.0
        %519 = vmatpush1.msra.mxu0 0.0
        %520 = vmatprep.subr.mxu0 0.0
        %521 = vmatpush1.msra.mxu0 0.0
        %522 = vmatprep.mubr.f32.mxu0 0.0
        %523 = vmatmul.mubr.f32.gmra.mrb[0].mxu0 %v380
        %v524 = vpop.f32.mrb[0].mxu0
        %v525 = vadd.f32 0.0, %v524
        %v526 = vpop.f32.mrb[0].mxu0
        %527 = vmatprep.mubr.f32.mxu0 0.0
        %528 = vmatmul.mubr.f32.gmra.mrb[0].mxu0 %v383
        %v529 = vpop.f32.mrb[0].mxu0
        %v530 = vadd.f32 0.0, %v529
        %v531 = vpop.f32.mrb[0].mxu0
        %532 = vmatprep.mubr.f32.mxu0 0.0
        %533 = vmatmul.mubr.f32.gmra.mrb[0].mxu0 %v388
        %v534 = vpop.f32.mrb[0].mxu0
        %v535 = vadd.f32 0.0, %v534
        %v536 = vpop.f32.mrb[0].mxu0
        %537 = vmatprep.mubr.f32.mxu0 0.0
        %538 = vmatmul.mubr.f32.gmra.mrb[0].mxu0 %v391
        %v539 = vpop.f32.mrb[0].mxu0
        %v540 = vadd.f32 0.0, %v539
        %v541 = vpop.f32.mrb[0].mxu0
        %542 = vmatprep.mubr.f32.mxu0 0.0
        %543 = vmatmul.mubr.f32.gmra.mrb[0].mxu0 %v396
        %v544 = vpop.f32.mrb[0].mxu0
        %v545 = vadd.f32 0.0, %v544
        %v546 = vpop.f32.mrb[0].mxu0
        %547 = vmatprep.mubr.f32.mxu0 0.0
        %548 = vmatmul.mubr.f32.gmra.mrb[0].mxu0 %v399
        %v549 = vpop.f32.mrb[0].mxu0
        %v550 = vadd.f32 0.0, %v549
        %v551 = vpop.f32.mrb[0].mxu0
        %552 = vmatprep.mubr.f32.mxu0 0.0
        %553 = vmatmul.mubr.f32.gmra.mrb[0].mxu0 %v404
        %v554 = vpop.f32.mrb[0].mxu0
        %v555 = vadd.f32 0.0, %v554
        %v556 = vpop.f32.mrb[0].mxu0
        %557 = vmatprep.mubr.f32.mxu0 0.0
        %558 = vmatmul.mubr.f32.gmra.mrb[0].mxu0 %v407
        %v559 = vpop.f32.mrb[0].mxu0
        %v560 = vadd.f32 0.0, %v559
        %v561 = vpop.f32.mrb[0].mxu0
        %562 = vmatprep.mubr.f32.mxu0 0.0
        %563 = vmatmul.mubr.f32.gmra.mrb[0].mxu0 %v412
        %v564 = vpop.f32.mrb[0].mxu0
        %v565 = vadd.f32 0.0, %v564
        %v566 = vpop.f32.mrb[0].mxu0
        %567 = vmatprep.mubr.f32.mxu0 0.0
        %568 = vmatmul.mubr.f32.gmra.mrb[0].mxu0 %v415
        %v569 = vpop.f32.mrb[0].mxu0
        %v570 = vadd.f32 0.0, %v569
        %v571 = vpop.f32.mrb[0].mxu0
        %572 = vmatprep.mubr.f32.mxu0 0.0
        %573 = vmatmul.mubr.f32.gmra.mrb[0].mxu0 %v420
        %v574 = vpop.f32.mrb[0].mxu0
        %v575 = vadd.f32 0.0, %v574
        %v576 = vpop.f32.mrb[0].mxu0
        %577 = vmatprep.mubr.f32.mxu0 0.0
        %578 = vmatmul.mubr.f32.gmra.mrb[0].mxu0 %v423
        %v579 = vpop.f32.mrb[0].mxu0
        %v580 = vadd.f32 0.0, %v579
        %v581 = vpop.f32.mrb[0].mxu0
        %582 = vmatprep.mubr.f32.mxu0 0.0
        %583 = vmatmul.mubr.f32.gmra.mrb[0].mxu0 %v428
        %v584 = vpop.f32.mrb[0].mxu0
        %v585 = vadd.f32 0.0, %v584
        %v586 = vpop.f32.mrb[0].mxu0
        %587 = vmatprep.mubr.f32.mxu0 0.0
        %588 = vmatmul.mubr.f32.gmra.mrb[0].mxu0 %v431
        %v589 = vpop.f32.mrb[0].mxu0
        %v590 = vadd.f32 0.0, %v589
        %v591 = vpop.f32.mrb[0].mxu0
        %592 = vmatprep.mubr.f32.mxu0 0.0
        %593 = vmatmul.mubr.f32.gmra.mrb[0].mxu0 %v436
        %v594 = vpop.f32.mrb[0].mxu0
        %v595 = vadd.f32 0.0, %v594
        %v596 = vpop.f32.mrb[0].mxu0
        %597 = vmatprep.mubr.f32.mxu0 0.0
        %598 = vmatmul.mubr.f32.gmra.mrb[0].mxu0 %v439
        %v599 = vpop.f32.mrb[0].mxu0
        %v600 = vadd.f32 0.0, %v599
        %v601 = vpop.f32.mrb[0].mxu0
        %602 = vdwg.mxu0
        // Predicated region
        $region49: #{tpu_custom_call.1} parent=31 // pred_check
          %p603 = pneg %p205
        $region50: #{tpu_custom_call.1} parent=31 // pred_check_branch
          %605 = sbr.rel (%p603) target = $region52
        $region51: #{tpu_custom_call.1} parent=31 // pred_region
          %v606 = vmax.f32 %v525, 0.0
          %v607 = vmax.f32 %v530, 0.0
          %v608 = vmax.f32 %v535, 0.0
          %v609 = vmax.f32 %v540, 0.0
          %v610 = vmax.f32 %v545, 0.0
          %v611 = vmax.f32 %v550, 0.0
          %v612 = vmax.f32 %v555, 0.0
          %v613 = vmax.f32 %v560, 0.0
          %v614 = vmax.f32 %v565, 0.0
          %v615 = vmax.f32 %v570, 0.0
          %v616 = vmax.f32 %v575, 0.0
          %v617 = vmax.f32 %v580, 0.0
          %v618 = vmax.f32 %v585, 0.0
          %v619 = vmax.f32 %v590, 0.0
          %v620 = vmax.f32 %v595, 0.0
          %v621 = vmax.f32 %v600, 0.0
          %622 = vst [vmem:[#allocation2] sm:$0xff] %v606
          %623 = vst [vmem:[#allocation2 + $0x8] sm:$0xff] %v607
          %624 = vst [vmem:[#allocation2 + $0x10] sm:$0xff] %v608
          %625 = vst [vmem:[#allocation2 + $0x18] sm:$0xff] %v609
          %626 = vst [vmem:[#allocation2 + $0x20] sm:$0xff] %v610
          %627 = vst [vmem:[#allocation2 + $0x28] sm:$0xff] %v611
          %628 = vst [vmem:[#allocation2 + $0x30] sm:$0xff] %v612
          %629 = vst [vmem:[#allocation2 + $0x38] sm:$0xff] %v613
          %630 = vst [vmem:[#allocation2 + $0x40] sm:$0xff] %v614
          %631 = vst [vmem:[#allocation2 + $0x48] sm:$0xff] %v615
          %632 = vst [vmem:[#allocation2 + $0x50] sm:$0xff] %v616
          %633 = vst [vmem:[#allocation2 + $0x58] sm:$0xff] %v617
          %634 = vst [vmem:[#allocation2 + $0x60] sm:$0xff] %v618
          %635 = vst [vmem:[#allocation2 + $0x68] sm:$0xff] %v619
          %636 = vst [vmem:[#allocation2 + $0x70] sm:$0xff] %v620
          %637 = vst [vmem:[#allocation2 + $0x78] sm:$0xff] %v621
        $region52: #{tpu_custom_call.1} parent=31 // pred_fallthru
          _
        %p638 = scmp.gt.s32.totalorder %s17, 0
        %p639 = scmp.lt.s32.totalorder %s17, 1
        %p640 = pnand %p638, %p639
        %p641 = pneg %p640
        // Predicated region
        $region53: #{tpu_custom_call.1} parent=31 // pred_check
          _
        $region54: #{tpu_custom_call.1} parent=31 // pred_check_branch
          %643 = sbr.rel (%p640) target = $region56
        $region55: #{tpu_custom_call.1} parent=31 // pred_region
          %v644 = vld [vmem:[#allocation2] sm:$0xff]
          %v645 = vld [vmem:[#allocation2 + $0x8] sm:$0xff]
          %v646 = vld [vmem:[#allocation2 + $0x10] sm:$0xff]
          %v647 = vld [vmem:[#allocation2 + $0x18] sm:$0xff]
          %v648 = vld [vmem:[#allocation2 + $0x20] sm:$0xff]
          %v649 = vld [vmem:[#allocation2 + $0x28] sm:$0xff]
          %v650 = vld [vmem:[#allocation2 + $0x30] sm:$0xff]
          %v651 = vld [vmem:[#allocation2 + $0x38] sm:$0xff]
          %v652 = vld [vmem:[#allocation2 + $0x40] sm:$0xff]
          %v653 = vld [vmem:[#allocation2 + $0x48] sm:$0xff]
          %v654 = vld [vmem:[#allocation2 + $0x50] sm:$0xff]
          %v655 = vld [vmem:[#allocation2 + $0x58] sm:$0xff]
          %v656 = vld [vmem:[#allocation2 + $0x60] sm:$0xff]
          %v657 = vld [vmem:[#allocation2 + $0x68] sm:$0xff]
          %v658 = vld [vmem:[#allocation2 + $0x70] sm:$0xff]
          %v659 = vld [vmem:[#allocation2 + $0x78] sm:$0xff]
          %v660 = vadd.f32 %v644, %v525
          %v661 = vadd.f32 %v645, %v530
          %v662 = vadd.f32 %v646, %v535
          %v663 = vadd.f32 %v647, %v540
          %v664 = vadd.f32 %v648, %v545
          %v665 = vadd.f32 %v649, %v550
          %v666 = vadd.f32 %v650, %v555
          %v667 = vadd.f32 %v651, %v560
          %v668 = vadd.f32 %v652, %v565
          %v669 = vadd.f32 %v653, %v570
          %v670 = vadd.f32 %v654, %v575
          %v671 = vadd.f32 %v655, %v580
          %v672 = vadd.f32 %v656, %v585
          %v673 = vadd.f32 %v657, %v590
          %v674 = vadd.f32 %v658, %v595
          %v675 = vadd.f32 %v659, %v600
          %v676 = vmax.f32 %v660, 0.0
          %v677 = vmax.f32 %v661, 0.0
          %v678 = vmax.f32 %v662, 0.0
          %v679 = vmax.f32 %v663, 0.0
          %v680 = vmax.f32 %v664, 0.0
          %v681 = vmax.f32 %v665, 0.0
          %v682 = vmax.f32 %v666, 0.0
          %v683 = vmax.f32 %v667, 0.0
          %v684 = vmax.f32 %v668, 0.0
          %v685 = vmax.f32 %v669, 0.0
          %v686 = vmax.f32 %v670, 0.0
          %v687 = vmax.f32 %v671, 0.0
          %v688 = vmax.f32 %v672, 0.0
          %v689 = vmax.f32 %v673, 0.0
          %v690 = vmax.f32 %v674, 0.0
          %v691 = vmax.f32 %v675, 0.0
          %692 = vst [vmem:[#allocation2] sm:$0xff] %v676
          %693 = vst [vmem:[#allocation2 + $0x8] sm:$0xff] %v677
          %694 = vst [vmem:[#allocation2 + $0x10] sm:$0xff] %v678
          %695 = vst [vmem:[#allocation2 + $0x18] sm:$0xff] %v679
          %696 = vst [vmem:[#allocation2 + $0x20] sm:$0xff] %v680
          %697 = vst [vmem:[#allocation2 + $0x28] sm:$0xff] %v681
          %698 = vst [vmem:[#allocation2 + $0x30] sm:$0xff] %v682
          %699 = vst [vmem:[#allocation2 + $0x38] sm:$0xff] %v683
          %700 = vst [vmem:[#allocation2 + $0x40] sm:$0xff] %v684
          %701 = vst [vmem:[#allocation2 + $0x48] sm:$0xff] %v685
          %702 = vst [vmem:[#allocation2 + $0x50] sm:$0xff] %v686
          %703 = vst [vmem:[#allocation2 + $0x58] sm:$0xff] %v687
          %704 = vst [vmem:[#allocation2 + $0x60] sm:$0xff] %v688
          %705 = vst [vmem:[#allocation2 + $0x68] sm:$0xff] %v689
          %706 = vst [vmem:[#allocation2 + $0x70] sm:$0xff] %v690
          %707 = vst [vmem:[#allocation2 + $0x78] sm:$0xff] %v691
        $region56: #{tpu_custom_call.1} parent=31 // pred_fallthru
          _
        %p708 = scmp.eq.s32.totalorder %s17, 1
        // Predicated region
        $region57: #{tpu_custom_call.1} parent=31 // pred_check
          %p709 = pneg %p708
        $region58: #{tpu_custom_call.1} parent=31 // pred_check_branch
          %711 = sbr.rel (%p709) target = $region60
        $region59: #{tpu_custom_call.1} parent=31 // pred_region
          %712 = vst [vmem:[#allocation9] sm:$0xff] %v525
          %713 = vst [vmem:[#allocation9 + $0x8] sm:$0xff] %v530
          %714 = vst [vmem:[#allocation9 + $0x10] sm:$0xff] %v535
          %715 = vst [vmem:[#allocation9 + $0x18] sm:$0xff] %v540
          %716 = vst [vmem:[#allocation9 + $0x20] sm:$0xff] %v545
          %717 = vst [vmem:[#allocation9 + $0x28] sm:$0xff] %v550
          %718 = vst [vmem:[#allocation9 + $0x30] sm:$0xff] %v555
          %719 = vst [vmem:[#allocation9 + $0x38] sm:$0xff] %v560
          %720 = vst [vmem:[#allocation9 + $0x40] sm:$0xff] %v565
          %721 = vst [vmem:[#allocation9 + $0x48] sm:$0xff] %v570
          %722 = vst [vmem:[#allocation9 + $0x50] sm:$0xff] %v575
          %723 = vst [vmem:[#allocation9 + $0x58] sm:$0xff] %v580
          %724 = vst [vmem:[#allocation9 + $0x60] sm:$0xff] %v585
          %725 = vst [vmem:[#allocation9 + $0x68] sm:$0xff] %v590
          %726 = vst [vmem:[#allocation9 + $0x70] sm:$0xff] %v595
          %727 = vst [vmem:[#allocation9 + $0x78] sm:$0xff] %v600
        $region60: #{tpu_custom_call.1} parent=31 // pred_fallthru
          _
        // Predicated region
        $region61: #{tpu_custom_call.1} parent=31 // pred_check
          %p728 = pneg %p98
        $region62: #{tpu_custom_call.1} parent=31 // pred_check_branch
          %730 = sbr.rel (%p728) target = $region64
        $region63: #{tpu_custom_call.1} parent=31 // pred_region
          %s732 = ssub.s32 2048, 2048
          %733 = vsyncadd [#allocation5], %s732
          %s734 = sshll.u32 [#allocation9], 4
          %s735 = int_to_ptr.vmem [resolvable:$true] %s734
          %740 = dma.vmem_to_hbm [thread:$0]  %s735, 2048, %s3, [#allocation5], 128, 128, 8
        $region64: #{tpu_custom_call.1} parent=31 // pred_fallthru
          _
        // Predicated region
        $region65: #{tpu_custom_call.1} parent=31 // pred_check
          %p741 = pneg %p98
        $region66: #{tpu_custom_call.1} parent=31 // pred_check_branch
          %743 = sbr.rel (%p741) target = $region68
        $region67: #{tpu_custom_call.1} parent=31 // pred_region
          %744 = dma.done [#allocation5], 2048
        $region68: #{tpu_custom_call.1} parent=31 // pred_fallthru
          _
      $region32: #{tpu_custom_call.1} parent=5 // pred_fallthru
        _
      %p745 = scmp.le.s32.totalorder 2, %s12
      // Predicated region
      $region69: #{tpu_custom_call.1} parent=5 // pred_check
        %p746 = pneg %p745
      $region70: #{tpu_custom_call.1} parent=5 // pred_check_branch
        %748 = sbr.rel (%p746) target = $region72
      $region71: #{tpu_custom_call.1} parent=5 // pred_region
        %s749 = ssub.s32 %s12, 2
      $region72: #{tpu_custom_call.1} parent=5 // pred_fallthru
        _
    $region6: #{tpu_custom_call.1} parent=1 // loop_footer
      %s16 = sadd.s32 1, %s12
    $region7: #{tpu_custom_call.1} parent=1 // loop_footer_branch
      %11 = sbr.rel target = $region3
    $region8: #{tpu_custom_call.1} parent=1 // loop_exit
      _
    %750 = vsyncpa [#allocation4], 1
    %s751 = scalar_lea.sflag [#allocation4], 1
    %752 = vsyncpa %s751, 1
    %753 = vsyncpa [#allocation7], 1
    %754 = vsyncpa [#allocation5], 1
    %s755 = scalar_lea.sflag [#allocation5], 1
    %756 = vsyncpa %s755, 1

</llo_original>
